<compile_context>
chip_gen: v5e
topology: v5e:2x2
jax: 0.10.0
libtpu: 0.0.40
codegen_flags: <defaults>
</compile_context>

<pallas_src>
import jax
import jax.numpy as jnp
import numpy as np
from jax.experimental import pallas as pl
from jax.experimental.pallas import tpu as pltpu


def _fit(dim, prefs):
    """Largest preferred tile that evenly divides `dim`, else the full dim."""
    for p in prefs:
        if dim % p == 0:
            return p
    return dim


def _vmem_limit_bytes(tm, tn, tk, x_itemsize, w_itemsize, o_itemsize):
    """Actual double-buffered footprint with margin, capped well below v7x's 64 MiB."""
    need = (2 * tm * tk * x_itemsize        # x tiles (double-buffered)
            + 2 * tk * tn * w_itemsize      # w tiles (double-buffered)
            + 2 * tm * tn * o_itemsize      # out tiles (double-buffered)
            + tm * tn * 4                   # f32 accumulator scratch
            + 2 * tn * 4                    # bias
            + 2 * 1024 * 1024)              # compiler-internal headroom
    return int(min(48 * 1024 * 1024, max(16 * 1024 * 1024, 2 * need)))


# ----------------------------------------------------------------------------
# Kernel 1: tiled linear encoder fused with L2 normalization (+ optional scale).
#   y = normalize(x @ W + b, axis=-1) * scale, emitted in bf16.
# MXU operands bf16 (x cast in-kernel), f32 VMEM accumulator, bias/norm/scale in
# the k==last epilogue only.  Requires tn == N (full embed dim per block).
# ----------------------------------------------------------------------------
def _encode_kernel(scale_ref, x_ref, w_ref, b_ref, o_ref, acc_ref):
    k = pl.program_id(2)

    @pl.when(k == 0)
    def _():
        acc_ref[...] = jnp.zeros_like(acc_ref)

    acc_ref[...] += jnp.dot(x_ref[...].astype(jnp.bfloat16), w_ref[...],
                            preferred_element_type=jnp.float32)

    @pl.when(k == pl.num_programs(2) - 1)
    def _():
        y = acc_ref[...] + b_ref[...]                                   # f32
        y = y * jax.lax.rsqrt(jnp.sum(y * y, axis=-1, keepdims=True))   # row L2 norm
        o_ref[...] = (y * scale_ref[0]).astype(o_ref.dtype)             # -> bf16


def encode_normalize(x, w, b, scale):
    M, K = x.shape
    Kw, N = w.shape
    assert K == Kw
    tm = _fit(M, (512, 256, 128, 64, 32, 16, 8))
    tk = _fit(K, (1024, 512, 256, 128))
    tn = N  # full embed dim per output block -> row norm is valid in the epilogue

    b = b.astype(jnp.float32).reshape(1, N)
    scale = jnp.asarray(scale, jnp.float32).reshape(1)

    grid = (M // tm, N // tn, K // tk)
    return pl.pallas_call(
        _encode_kernel,
        out_shape=jax.ShapeDtypeStruct((M, N), jnp.bfloat16),
        grid_spec=pltpu.PrefetchScalarGridSpec(
            num_scalar_prefetch=0,
            grid=grid,
            in_specs=[
                pl.BlockSpec(memory_space=pltpu.MemorySpace.SMEM),   # scale (1,)
                pl.BlockSpec((tm, tk), lambda i, j, k: (i, k)),
                pl.BlockSpec((tk, tn), lambda i, j, k: (k, j)),
                pl.BlockSpec((1, tn), lambda i, j, k: (0, j)),
            ],
            out_specs=pl.BlockSpec((tm, tn), lambda i, j, k: (i, j)),
            scratch_shapes=[pltpu.VMEM((tm, tn), jnp.float32)],
        ),
        compiler_params=pltpu.CompilerParams(
            dimension_semantics=("parallel", "parallel", "arbitrary"),
            vmem_limit_bytes=_vmem_limit_bytes(
                tm, tn, tk, x.dtype.itemsize, w.dtype.itemsize, 2),
        ),
    )(scale, x, w, b)


# ----------------------------------------------------------------------------
# Kernel 2: blocked symmetric CLIP loss over pre-normalized bf16 embeddings.
#
# Inputs:
#   txt_hbm : (B, D) bf16, L2-normalized text embeddings * (1/temperature)
#   img_ref : (tc, D) bf16 tile of L2-normalized image embeddings
# Grid axis c iterates over image (logits-column) tiles; the BxB logits matrix
# is never materialized.  One exp pass per tile with a scalar block shift feeds
# both the caption-direction online LSE and the exact column-direction LSE.
# ----------------------------------------------------------------------------
def _clip_loss_kernel(txt_hbm, img_ref, loss_ref, t_buf, m_i, l_i, col_acc, diag_sum):
    c = pl.program_id(0)
    tc = img_ref.shape[0]
    B = t_buf.shape[0]

    @pl.when(c == 0)
    def _():
        pltpu.sync_copy(txt_hbm, t_buf)     # single resident VMEM copy of text
        m_i[...] = jnp.full_like(m_i, -jnp.inf)
        l_i[...] = jnp.zeros_like(l_i)
        col_acc[...] = jnp.zeros_like(col_acc)
        diag_sum[...] = jnp.zeros_like(diag_sum)

    v = img_ref[...]                        # (tc, D) bf16
    t = t_buf[...]                          # (B, D) bf16 (temperature already folded in)

    # logits tile (B, tc): bf16 MXU operands, f32 accumulation.
    logits = jax.lax.dot_general(
        t, v, (((1,), (1,)), ((), ())), preferred_element_type=jnp.float32)

    # Diagonal entries of this column block via a (tc, D) row-wise dot.
    start = pl.multiple_of(c * tc, tc)
    t_slice = t_buf[pl.ds(start, tc), :].astype(jnp.float32)
    diag_blk = jnp.sum(t_slice * v.astype(jnp.float32), axis=-1, keepdims=True)  # (tc,1)
    diag_sum[...] += jnp.sum(diag_blk, axis=0, keepdims=True)                    # (1,1)

    # Single full-tile exp with a scalar (per-block max) shift. Entries >~87
    # below the block max flush to zero, which is harmless for the sums (only a
    # concern for pathologically small temperatures; default 0.07 is fine).
    m_blk = jnp.max(jnp.max(logits, axis=-1, keepdims=True),
                    axis=0, keepdims=True)                       # (1, 1)
    e = jnp.exp(logits - m_blk)                                  # (B, tc) - one exp pass
    row_s = jnp.sum(e, axis=-1, keepdims=True)                   # (B, 1)
    col_s = jnp.sum(e, axis=0, keepdims=True)                    # (1, tc)

    # Caption direction: online logsumexp across column blocks (cheap (B,1) exps).
    m_new = jnp.maximum(m_i[...], m_blk)
    l_i[...] = (l_i[...] * jnp.exp(m_i[...] - m_new)
                + row_s * jnp.exp(m_blk - m_new))
    m_i[...] = m_new

    # Image direction: exact logsumexp over all B rows for this column block.
    col_acc[...] += jnp.sum(m_blk + jnp.log(col_s), axis=-1, keepdims=True)      # (1,1)

    @pl.when(c == pl.num_programs(0) - 1)
    def _():
        row_total = jnp.sum(m_i[...] + jnp.log(l_i[...]), axis=0, keepdims=True)  # (1,1)
        loss_ref[...] = 0.5 * (row_total + col_acc[...]
                               - 2.0 * diag_sum[...]) * (1.0 / B)


def clip_loss_pallas(text_scaled, image_norm, *, tc=None):
    B, D = text_scaled.shape
    assert image_norm.shape == (B, D)
    if tc is None:
        tc = _fit(B, (512, 256, 128, 64, 32, 16, 8))
    assert B % tc == 0

    # TODO(synk): on v7x, add a leading "parallel" axis over text-row tiles and a
    # cross-core combine of the column-LSE partials to use both TensorCores.
    out = pl.pallas_call(
        _clip_loss_kernel,
        out_shape=jax.ShapeDtypeStruct((1, 1), jnp.float32),
        grid_spec=pltpu.PrefetchScalarGridSpec(
            num_scalar_prefetch=0,
            grid=(B // tc,),
            in_specs=[
                pl.BlockSpec(memory_space=pl.ANY),           # text: copied to VMEM once
                pl.BlockSpec((tc, D), lambda c: (c, 0)),     # image column tile
            ],
            out_specs=pl.BlockSpec((1, 1), lambda c: (0, 0)),
            scratch_shapes=[
                pltpu.VMEM((B, D), jnp.bfloat16),   # single resident text copy
                pltpu.VMEM((B, 1), jnp.float32),    # m_i (running row max)
                pltpu.VMEM((B, 1), jnp.float32),    # l_i (running row sum-exp)
                pltpu.VMEM((1, 1), jnp.float32),    # col_acc (sum of column LSEs)
                pltpu.VMEM((1, 1), jnp.float32),    # diag_sum (sum of logits[i,i])
            ],
        ),
        compiler_params=pltpu.CompilerParams(
            dimension_semantics=("arbitrary",),
        ),
    )(text_scaled, image_norm)
    return out[0, 0]


# ----------------------------------------------------------------------------
# CLIPModel wrapper (deterministic synthetic parameters; weights stored bf16 once).
# ----------------------------------------------------------------------------
class CLIPModel:
    def __init__(self, txt_dim, img_dim, embed_dim, init_temperature=0.07, seed=0):
        k = jax.random.PRNGKey(seed)
        k1, k2, k3, k4 = jax.random.split(k, 4)
        s_t = 1.0 / np.sqrt(txt_dim)
        s_i = 1.0 / np.sqrt(img_dim)
        # text encoder: Linear(txt_dim -> embed_dim); image encoder: Linear(C*H*W -> embed_dim)
        self.w_txt = jax.random.uniform(k1, (txt_dim, embed_dim), jnp.float32,
                                        -s_t, s_t).astype(jnp.bfloat16)
        self.b_txt = jax.random.uniform(k2, (1, embed_dim), jnp.float32, -s_t, s_t)
        self.w_img = jax.random.uniform(k3, (img_dim, embed_dim), jnp.float32,
                                        -s_i, s_i).astype(jnp.bfloat16)
        self.b_img = jax.random.uniform(k4, (1, embed_dim), jnp.float32, -s_i, s_i)
        self.temperature = jnp.asarray(init_temperature, jnp.float32)

    def __call__(self, txts, images, *, loss_tile=None):
        B = images.shape[0]
        img_flat = images.reshape(B, -1)                      # NCHW -> (B, C*H*W)
        inv_temp = (1.0 / self.temperature).astype(jnp.float32)
        # Encoders emit L2-normalized bf16 embeddings; 1/temperature folded into text.
        text_n = encode_normalize(txts, self.w_txt, self.b_txt, inv_temp)
        image_n = encode_normalize(img_flat, self.w_img, self.b_img, 1.0)
        return clip_loss_pallas(text_n, image_n, tc=loss_tile)


# ----------------------------------------------------------------------------
# Pure-JAX reference following the same dtype path (bf16 MXU operands, f32 acc,
# f32 norm, bf16 normalized embeddings) for a tight correctness check.
# ----------------------------------------------------------------------------
def _reference_loss(model, txts, images):
    B = images.shape[0]
    img_flat = images.reshape(B, -1)
    inv_temp = (1.0 / model.temperature).astype(jnp.float32)
    te = jnp.dot(txts.astype(jnp.bfloat16), model.w_txt,
                 preferred_element_type=jnp.float32) + model.b_txt
    ie = jnp.dot(img_flat.astype(jnp.bfloat16), model.w_img,
                 preferred_element_type=jnp.float32) + model.b_img
    te = te * jax.lax.rsqrt(jnp.sum(te * te, axis=-1, keepdims=True))
    ie = ie * jax.lax.rsqrt(jnp.sum(ie * ie, axis=-1, keepdims=True))
    te_b = (te * inv_temp).astype(jnp.bfloat16)
    ie_b = ie.astype(jnp.bfloat16)
    logits = jnp.dot(te_b, ie_b.T, preferred_element_type=jnp.float32)

    def ce(lg):
        lse = jax.scipy.special.logsumexp(lg, axis=-1)
        return jnp.mean(lse - jnp.diag(lg))

    return 0.5 * (ce(logits) + ce(logits.T))


if __name__ == "__main__":
    key = jax.random.PRNGKey(0)
    k_txt, k_img = jax.random.split(key)

    B, TXT_DIM = 16, 32
    C, H, W = 4, 32, 16          # image encoder K = 2048 -> exercises the multi-block K grid
    EMBED_DIM = 128

    txts = jax.random.normal(k_txt, (B, TXT_DIM), jnp.float32)
    images = jax.random.normal(k_img, (B, C, H, W), jnp.float32)   # NCHW, like PyTorch

    model = CLIPModel(txt_dim=TXT_DIM, img_dim=C * H * W, embed_dim=EMBED_DIM)

    # loss_tile=8 forces two image/column blocks so the online-logsumexp path
    # (multi-block accumulation) is exercised even at this small batch.
    loss = model(txts, images, loss_tile=8)
    loss = jax.block_until_ready(loss)

    ref = jax.block_until_ready(_reference_loss(model, txts, images))
    assert np.allclose(np.asarray(loss), np.asarray(ref), rtol=2e-3, atol=2e-3), (loss, ref)

    print("KERNEL_OK")
</pallas_src>

<mosaic_0001>
module attributes {stable_mosaic.version = 11 : i64} {
  func.func @_encode_kernel(%arg0: i32, %arg1: i32, %arg2: i32, %arg3: memref<1xf32, #tpu.memory_space<smem>>, %arg4: memref<16x32xf32, #tpu.memory_space<vmem>>, %arg5: memref<32x128xbf16, #tpu.memory_space<vmem>>, %arg6: memref<1x128xf32, #tpu.memory_space<vmem>>, %arg7: memref<16x128xbf16, #tpu.memory_space<vmem>>, %arg8: memref<16x128xf32, #tpu.memory_space<vmem>>) attributes {dimension_semantics = [#tpu.dimension_semantics<parallel>, #tpu.dimension_semantics<parallel>, #tpu.dimension_semantics<arbitrary>], iteration_bounds = array<i64: 1, 1, 1>, scalar_prefetch = 0 : i64, scratch_operands = 1 : i64, tpu.core_type = #tpu.core_type<tc>, window_params = [{transform_indices = @transform_0, window_bounds = array<i64: 1>}, {transform_indices = @transform_1, window_bounds = array<i64: 16, 32>}, {transform_indices = @transform_2, window_bounds = array<i64: 32, 128>}, {transform_indices = @transform_3, window_bounds = array<i64: 1, 128>}, {transform_indices = @transform_4, window_bounds = array<i64: 16, 128>}]} {
    %c0_i32 = arith.constant 0 : i32
    %0 = arith.cmpi eq, %arg2, %c0_i32 : i32
    %1 = arith.extui %0 : i1 to i32
    %c0_i32_0 = arith.constant 0 : i32
    %2 = arith.cmpi ne, %1, %c0_i32_0 : i32
    scf.if %2 {
      %cst_10 = arith.constant 0.000000e+00 : f32
      %13 = vector.broadcast %cst_10 : f32 to vector<16x128xf32>
      %c0_11 = arith.constant 0 : index
      %c0_12 = arith.constant 0 : index
      %14 = vector.load %arg8[%c0_11, %c0_12] : memref<16x128xf32, #tpu.memory_space<vmem>>, vector<16x128xf32>
      tpu.vector_store %arg8[%c0_11, %c0_12], %13 {strides = array<i32>} : memref<16x128xf32, #tpu.memory_space<vmem>>, vector<16x128xf32>,
    } else {
    }
    %c0 = arith.constant 0 : index
    %c0_1 = arith.constant 0 : index
    %3 = vector.load %arg8[%c0, %c0_1] : memref<16x128xf32, #tpu.memory_space<vmem>>, vector<16x128xf32>
    %c0_2 = arith.constant 0 : index
    %c0_3 = arith.constant 0 : index
    %4 = vector.load %arg4[%c0_2, %c0_3] : memref<16x32xf32, #tpu.memory_space<vmem>>, vector<16x32xf32>
    %5 = arith.truncf %4 : vector<16x32xf32> to vector<16x32xbf16>
    %c0_4 = arith.constant 0 : index
    %c0_5 = arith.constant 0 : index
    %6 = vector.load %arg5[%c0_4, %c0_5] : memref<32x128xbf16, #tpu.memory_space<vmem>>, vector<32x128xbf16>
    %cst = arith.constant dense<0.000000e+00> : vector<16x128xf32>
    %7 = tpu.matmul %5, %6, %cst {dimension_numbers = #tpu.dot_dimension_numbers<[1], [0], [0], [1], [0, 0, 1, 1], [], []>} : vector<16x32xbf16>, vector<32x128xbf16>, vector<16x128xf32> -> vector<16x128xf32>
    %8 = arith.addf %3, %7 : vector<16x128xf32>
    %c0_6 = arith.constant 0 : index
    %c0_7 = arith.constant 0 : index
    %9 = vector.load %arg8[%c0_6, %c0_7] : memref<16x128xf32, #tpu.memory_space<vmem>>, vector<16x128xf32>
    tpu.vector_store %arg8[%c0_6, %c0_7], %8 {strides = array<i32>} : memref<16x128xf32, #tpu.memory_space<vmem>>, vector<16x128xf32>,
    %c0_i32_8 = arith.constant 0 : i32
    %10 = arith.cmpi eq, %arg2, %c0_i32_8 : i32
    %11 = arith.extui %10 : i1 to i32
    %c0_i32_9 = arith.constant 0 : i32
    %12 = arith.cmpi ne, %11, %c0_i32_9 : i32
    scf.if %12 {
      %c0_10 = arith.constant 0 : index
      %c0_11 = arith.constant 0 : index
      %13 = vector.load %arg8[%c0_10, %c0_11] : memref<16x128xf32, #tpu.memory_space<vmem>>, vector<16x128xf32>
      %c0_12 = arith.constant 0 : index
      %c0_13 = arith.constant 0 : index
      %14 = vector.load %arg6[%c0_12, %c0_13] : memref<1x128xf32, #tpu.memory_space<vmem>>, vector<1x128xf32>
      %15 = vector.broadcast %14 : vector<1x128xf32> to vector<16x128xf32>
      %16 = arith.addf %13, %15 : vector<16x128xf32>
      %17 = arith.mulf %16, %16 : vector<16x128xf32>
      %cst_14 = arith.constant dense<0.000000e+00> : vector<16xf32>
      %18 = vector.multi_reduction <add>, %17, %cst_14 [1] : vector<16x128xf32> to vector<16xf32>
      %19 = vector.shape_cast %18 : vector<16xf32> to vector<16x1xf32>
      %20 = math.rsqrt %19 : vector<16x1xf32>
      %21 = vector.broadcast %20 : vector<16x1xf32> to vector<16x128xf32>
      %22 = arith.mulf %16, %21 : vector<16x128xf32>
      %c0_15 = arith.constant 0 : index
      %23 = memref.load %arg3[%c0_15] : memref<1xf32, #tpu.memory_space<smem>>
      %24 = vector.broadcast %23 : f32 to vector<16x128xf32>
      %25 = arith.mulf %22, %24 : vector<16x128xf32>
      %26 = arith.truncf %25 : vector<16x128xf32> to vector<16x128xbf16>
      %c0_16 = arith.constant 0 : index
      %c0_17 = arith.constant 0 : index
      %27 = vector.load %arg7[%c0_16, %c0_17] : memref<16x128xbf16, #tpu.memory_space<vmem>>, vector<16x128xbf16>
      tpu.vector_store %arg7[%c0_16, %c0_17], %26 {strides = array<i32>} : memref<16x128xbf16, #tpu.memory_space<vmem>>, vector<16x128xbf16>,
    } else {
    }
    return
  }
  func.func @transform_0(%arg0: i32, %arg1: i32, %arg2: i32) -> i32 {
    %c0_i32 = arith.constant 0 : i32
    %c0_i32_0 = arith.constant 0 : i32
    return %c0_i32 : i32
  }
  func.func @transform_1(%arg0: i32, %arg1: i32, %arg2: i32) -> (i32, i32) {
    %c0_i32 = arith.constant 0 : i32
    return %arg0, %arg2 : i32, i32
  }
  func.func @transform_2(%arg0: i32, %arg1: i32, %arg2: i32) -> (i32, i32) {
    %c0_i32 = arith.constant 0 : i32
    return %arg2, %arg1 : i32, i32
  }
  func.func @transform_3(%arg0: i32, %arg1: i32, %arg2: i32) -> (i32, i32) {
    %c0_i32 = arith.constant 0 : i32
    %c0_i32_0 = arith.constant 0 : i32
    return %c0_i32, %arg1 : i32, i32
  }
  func.func @transform_4(%arg0: i32, %arg1: i32, %arg2: i32) -> (i32, i32) {
    %c0_i32 = arith.constant 0 : i32
    return %arg0, %arg1 : i32, i32
  }
}

</mosaic_0001>

<llo_original>
// kernel: tpu_custom_call.1
$region0: #{tpu_custom_call.1}
  #allocation0 [shape = 'u32[]', space=smem, size = 0x4, offset = 0x4, fixed_abs, tag = 'smem constant byte address 0x4 - core index']
  #allocation1 [shape = 'u32[72,128]{1,0:T(1,128)}', space=vmem, size = 0x9000, scoped, tag = 'internal scratch']
  #allocation2 [shape = 'f32[16,128]{1,0:T(8,128)}', space=vmem, size = 0x2000, scoped, tag = 'scratch operand']
  #allocation3 [shape = 'f32[1]{0:T(128)S(6)}', space=smem, size = 0x200, scoped, tag = 'scoped memory for tpu_custom_call.1']
  %s0 = inlined_call_operand.<no memory space> [shape: f32[1], index: 0, kind: input, shape index: {}]
  %s1 = inlined_call_operand.hbm [shape: f32[16,32], index: 1, kind: input, shape index: {}]
  %s2 = inlined_call_operand.hbm [shape: bf16[32,128], index: 2, kind: input, shape index: {}]
  %s3 = inlined_call_operand.vmem [shape: f32[1,128], index: 3, kind: input, shape index: {}]
  %s4 = inlined_call_operand.hbm [shape: bf16[16,128], index: 4, kind: output, shape index: {}]
  %s5 = sld [smem:[#allocation0]]
  $region42: #{tpu_custom_call.1} parent=0
    _
  %s7 = ssub.s32 1, %s5
  %s8 = scalar_select 0, %s7, %s5
  %9 = sst [smem:[#allocation3]] %s0
  $region1: #{tpu_custom_call.1} parent=0
    #allocation4 [shape = 'u8[8192]{0}', space=vmem, size = 0x2000, scoped, tag = 'input window, operand 1, single buffered']
    #allocation5 [shape = 's32[1]{0}', space=sflag, size = 0x4, scoped, tag = 'scoped memory for tpu_custom_call.1']
    #allocation6 [shape = 's32[1]{0}', space=sflag, size = 0x4, scoped, tag = 'scoped memory for tpu_custom_call.1']
    #allocation7 [shape = 'u8[8192]{0}', space=vmem, size = 0x2000, scoped, tag = 'input window, operand 2, single buffered']
    #allocation8 [shape = 's32[1]{0}', space=sflag, size = 0x4, scoped, tag = 'scoped memory for tpu_custom_call.1']
    #allocation9 [shape = 'u8[4096]{0}', space=vmem, size = 0x1000, scoped, tag = 'output window, operand 0, single buffered']
    %10 = vsyncpa [#allocation5], 0
    %11 = vsyncpa [#allocation8], 0
    %12 = vsyncpa [#allocation6], 0
    // Predicated region
    $region2: #{tpu_custom_call.1} parent=1 // pred_check
      _
    $region3: #{tpu_custom_call.1} parent=1 // pred_check_branch
      %14 = sbr.rel (0) target = $region5
    $region4: #{tpu_custom_call.1} parent=1 // pred_region
      _
    $region5: #{tpu_custom_call.1} parent=1 // pred_fallthru
      _
    // Predicated region
    $region6: #{tpu_custom_call.1} parent=1 // pred_check
      _
    $region7: #{tpu_custom_call.1} parent=1 // pred_check_branch
      %16 = sbr.rel (0) target = $region9
    $region8: #{tpu_custom_call.1} parent=1 // pred_region
      %18 = vsyncadd [#allocation5], 0
      %s19 = sshll.u32 %s1, 4
      %s20 = int_to_ptr.hbm [resolvable:$true] %s19
      %s21 = sshll.u32 [#allocation4], 4
      %s22 = int_to_ptr.vmem [resolvable:$true] %s21
      %27 = dma.hbm_to_vmem [thread:$0]  %s20, 256, %s22, [#allocation5], 128, 128, 8
    $region9: #{tpu_custom_call.1} parent=1 // pred_fallthru
      _
    // Predicated region
    $region10: #{tpu_custom_call.1} parent=1 // pred_check
      _
    $region11: #{tpu_custom_call.1} parent=1 // pred_check_branch
      %29 = sbr.rel (0) target = $region13
    $region12: #{tpu_custom_call.1} parent=1 // pred_region
      %31 = vsyncadd [#allocation8], 0
      %s32 = sshll.u32 %s2, 4
      %s33 = int_to_ptr.hbm [resolvable:$true] %s32
      %s34 = sshll.u32 [#allocation7], 4
      %s35 = int_to_ptr.vmem [resolvable:$true] %s34
      %40 = dma.hbm_to_vmem [thread:$0]  %s33, 256, %s35, [#allocation8], 64, 64, 4
    $region13: #{tpu_custom_call.1} parent=1 // pred_fallthru
      _
    // Predicated region
    $region14: #{tpu_custom_call.1} parent=1 // pred_check
      _
    $region15: #{tpu_custom_call.1} parent=1 // pred_check_branch
      %42 = sbr.rel (0) target = $region17
    $region16: #{tpu_custom_call.1} parent=1 // pred_region
      _
    $region17: #{tpu_custom_call.1} parent=1 // pred_fallthru
      _
    // Predicated region
    $region18: #{tpu_custom_call.1} parent=1 // pred_check
      _
    $region19: #{tpu_custom_call.1} parent=1 // pred_check_branch
      %44 = sbr.rel (0) target = $region21
    $region20: #{tpu_custom_call.1} parent=1 // pred_region
      %46 = dma.done [#allocation5], 256
    $region21: #{tpu_custom_call.1} parent=1 // pred_fallthru
      _
    // Predicated region
    $region22: #{tpu_custom_call.1} parent=1 // pred_check
      _
    $region23: #{tpu_custom_call.1} parent=1 // pred_check_branch
      %48 = sbr.rel (0) target = $region25
    $region24: #{tpu_custom_call.1} parent=1 // pred_region
      %50 = dma.done [#allocation8], 256
    $region25: #{tpu_custom_call.1} parent=1 // pred_fallthru
      _
    %p52 = scmp.eq.s32.totalorder 0, 0
    // Predicated region
    $region26: #{tpu_custom_call.1} parent=1 // pred_check
      %p53 = pneg %p52
    $region27: #{tpu_custom_call.1} parent=1 // pred_check_branch
      %55 = sbr.rel (%p53) target = $region29
    $region28: #{tpu_custom_call.1} parent=1 // pred_region
      %56 = vst [vmem:[#allocation2] sm:$0xff] 0.0
      %57 = vst [vmem:[#allocation2 + $0x8] sm:$0xff] 0.0
    $region29: #{tpu_custom_call.1} parent=1 // pred_fallthru
      _
    %v58 = vld [vmem:[#allocation2] sm:$0xff]
    %v59 = vld [vmem:[#allocation2 + $0x8] sm:$0xff]
    %v60 = vld [vmem:[#allocation4] sm:$0xff]
    %v61 = vld [vmem:[#allocation4 + $0x8] sm:$0xff]
    %v62 = vpack.c.bf16 %v61, %v60
    %v63 = vld [vmem:[#allocation7] sm:$0xf]
    %v64 = vld [vmem:[#allocation7 + $0x4] sm:$0xf]
    %v65 = vld [vmem:[#allocation7 + $0x8] sm:$0xf]
    %v66 = vld [vmem:[#allocation7 + $0xc] sm:$0xf]
    %v71 = vunpack.c.l.b16 %v63
    %v72 = vunpack.c.l.b16 %v64
    %v73 = vunpack.c.l.b16 %v65
    %v74 = vunpack.c.l.b16 %v66
    %v75 = vpack.c.b16 %v72, %v71
    %v76 = vpack.c.b16 %v74, %v73
    %vm79 = vcmask 261120
    %v81 = vsel %vm79, %v62, 0
    %83 = vmatpush.bf16.msra.mxu0 0
    %84 = vmatpush.bf16.msra.mxu0 0
    %85 = vmatpush.bf16.msra.mxu0 0
    %86 = vmatpush.bf16.msra.mxu0 0
    %87 = vmatpush.bf16.msra.mxu0 0
    %88 = vmatpush.bf16.msra.mxu0 0
    %89 = vmatpush.bf16.msra.mxu0 %v76
    %90 = vmatpush.bf16.msra.mxu0 %v75
    %91 = vmatmul.bf16.gmra.mxu0 %v81
    %v92 = vpop.f32.mrf.mxu0
    %v93 = vadd.f32 0.0, %v92
    %v94 = vpop.f32.mrf.mxu0
    %v95 = vadd.f32 0.0, %v94
    %96 = vdwg.mxu0
    %v97 = vadd.f32 %v58, %v93
    %v98 = vadd.f32 %v59, %v95
    %99 = vst [vmem:[#allocation2] sm:$0xff] %v97
    %100 = vst [vmem:[#allocation2 + $0x8] sm:$0xff] %v98
    // Predicated region
    $region30: #{tpu_custom_call.1} parent=1 // pred_check
      %p101 = pneg %p52
    $region31: #{tpu_custom_call.1} parent=1 // pred_check_branch
      %103 = sbr.rel (%p101) target = $region33
    $region32: #{tpu_custom_call.1} parent=1 // pred_region
      %v104 = vld [vmem:[#allocation2] sm:$0xff]
      %v105 = vld [vmem:[#allocation2 + $0x8] sm:$0xff]
      %v106 = vld [vmem:[%s3] sm:$0x1]
      %v108 = vperm.slane %v106, 0
      %v110 = vadd.f32 %v104, %v108
      %v111 = vadd.f32 %v105, %v108
      %v112 = vmul.f32 %v110, %v110
      %v113 = vmul.f32 %v111, %v111
      %114 = vadd.xlane.f32.xlu0 %v112
      %v115 = vpop.xlane.xlu0 %114
      %116 = vadd.xlane.f32.xlu0 %v113
      %v117 = vpop.xlane.xlu0 %116
      %v118 = vrsqrt.pop %v115
      %v119 = vmul.f32 %v118, %v115
      %v120 = vmul.f32 %v119, %v118
      %v121 = vmul.f32 0.5, %v120
      %v122 = vsub.f32 1.5, %v121
      %v123 = vmul.f32 %v118, %v122
      %vm124 = vweird.f32 %v115
      %vm125 = vweird.f32 %v118
      %vm126 = vmor %vm124, %vm125
      %v127 = vsel %vm126, %v118, %v123
      %v128 = vrsqrt.pop %v117
      %v129 = vmul.f32 %v128, %v117
      %v130 = vmul.f32 %v129, %v128
      %v131 = vmul.f32 0.5, %v130
      %v132 = vsub.f32 1.5, %v131
      %v133 = vmul.f32 %v128, %v132
      %vm134 = vweird.f32 %v117
      %vm135 = vweird.f32 %v128
      %vm136 = vmor %vm134, %vm135
      %v137 = vsel %vm136, %v128, %v133
      %v138 = vmul.f32 %v110, %v127
      %v139 = vmul.f32 %v111, %v137
      %s140 = sld [smem:[#allocation3]]
      %v141 = vstv %s140
      %v142 = vmul.f32 %v138, %v141
      %v143 = vmul.f32 %v139, %v141
      %v144 = vpack.c.bf16 %v142, %v142
      %v145 = vpack.c.bf16 %v143, %v143
      %146 = vst [vmem:[#allocation9] sm:$0xf] %v144
      %147 = vst [vmem:[#allocation9 + $0x4] sm:$0xf] %v145
    $region33: #{tpu_custom_call.1} parent=1 // pred_fallthru
      _
    // Predicated region
    $region34: #{tpu_custom_call.1} parent=1 // pred_check
      _
    $region35: #{tpu_custom_call.1} parent=1 // pred_check_branch
      %149 = sbr.rel (0) target = $region37
    $region36: #{tpu_custom_call.1} parent=1 // pred_region
      %151 = vsyncadd [#allocation6], 0
      %s152 = sshll.u32 [#allocation9], 4
      %s153 = int_to_ptr.vmem [resolvable:$true] %s152
      %s154 = sshll.u32 %s4, 4
      %s155 = int_to_ptr.hbm [resolvable:$true] %s154
      %160 = dma.vmem_to_hbm [thread:$0]  %s153, 128, %s155, [#allocation6], 64, 64, 4
    $region37: #{tpu_custom_call.1} parent=1 // pred_fallthru
      _
    // Predicated region
    $region38: #{tpu_custom_call.1} parent=1 // pred_check
      _
    $region39: #{tpu_custom_call.1} parent=1 // pred_check_branch
      %162 = sbr.rel (0) target = $region41
    $region40: #{tpu_custom_call.1} parent=1 // pred_region
      %164 = dma.done [#allocation6], 128
    $region41: #{tpu_custom_call.1} parent=1 // pred_fallthru
      _
    %165 = vsyncpa [#allocation5], 1
    %166 = vsyncpa [#allocation8], 1
    %167 = vsyncpa [#allocation6], 1

</llo_original>
